<compile_context>
chip_gen: v6e
topology: v6e:2x2x1
jax: 0.10.0
libtpu: 0.0.40
codegen_flags: <defaults>
</compile_context>

<pallas_src>
import math
import functools

import jax
import jax.numpy as jnp
from jax import lax
from jax.experimental import pallas as pl
from jax.experimental.pallas import tpu as pltpu


# ----------------------------------------------------------------------------
# In-kernel helpers
# ----------------------------------------------------------------------------
def _layernorm(x, gamma, beta, eps=1e-5):
    # PyTorch nn.LayerNorm: biased variance over last dim, eps inside sqrt.
    mean = jnp.mean(x, axis=-1, keepdims=True)
    var = jnp.mean((x - mean) ** 2, axis=-1, keepdims=True)
    return (x - mean) * lax.rsqrt(var + eps) * gamma + beta


# ----------------------------------------------------------------------------
# One fused transformer block. Grid = (B // Bt,); each step processes Bt full
# sequences so the MXU M dimension sees Bt*S rows.
# ----------------------------------------------------------------------------
def encoder_block_kernel(x_ref, vlen_ref,
                         wqkv_ref, wo_ref,
                         ln1_g_ref, ln1_b_ref,
                         w1_ref, b1_ref, w2_ref, b2_ref,
                         ln2_g_ref, ln2_b_ref,
                         out_ref, *, num_heads):
    bt, S, H = x_ref.shape
    dh = H // num_heads
    scale = 1.0 / math.sqrt(dh)

    x = x_ref[...]                                   # (Bt, S, H) f32
    x_flat = x.reshape(bt * S, H)
    xb = x_flat.astype(jnp.bfloat16)                 # bf16 operands, f32 acc

    # Fused QKV projection: one (Bt*S, H) @ (H, 3H) bf16 matmul.
    qkv = jnp.dot(xb, wqkv_ref[...], preferred_element_type=jnp.float32)
    qkvb = qkv.astype(jnp.bfloat16)                  # cast once, slice per head
    q = qkvb[:, 0:H].reshape(bt, S, H)
    k = qkvb[:, H:2 * H].reshape(bt, S, H)
    v = qkvb[:, 2 * H:3 * H].reshape(bt, S, H)

    # masked_softmax mask: key positions >= valid_len get -1e6 before softmax.
    # Built per sequence from a lane iota (no full (S,S) integer iota).
    vlen = vlen_ref[...]                                         # (Bt, 1) int32
    kpos = lax.broadcasted_iota(jnp.int32, (bt, 1, S), 2)        # key positions
    mask = kpos < vlen.reshape(bt, 1, 1)                         # (Bt, 1, S)

    # Multi-head attention. Heads are a small static loop; within each head all
    # Bt sequences go through one batched MXU matmul (einsum contracts dh, so
    # no explicit k^T).  Head outputs are concatenated along lanes so the
    # output projection is a single (Bt*S, H) @ (H, H) matmul.
    o_heads = []
    for h in range(num_heads):
        sl = slice(h * dh, (h + 1) * dh)
        qh, kh, vh = q[:, :, sl], k[:, :, sl], v[:, :, sl]
        s = jnp.einsum("bqd,bkd->bqk", qh, kh,
                       preferred_element_type=jnp.float32) * scale
        s = jnp.where(mask, s, -1000000.0)
        s = s - jnp.max(s, axis=-1, keepdims=True)               # f32 softmax
        p = jnp.exp(s)
        p = p * pl.reciprocal(jnp.sum(p, axis=-1, keepdims=True), approx=True)
        o_heads.append(jnp.einsum("bqk,bkd->bqd", p.astype(jnp.bfloat16), vh,
                                  preferred_element_type=jnp.float32))
    o = o_heads[0] if num_heads == 1 else jnp.concatenate(o_heads, axis=-1)
    attn = jnp.dot(o.reshape(bt * S, H).astype(jnp.bfloat16), wo_ref[...],
                   preferred_element_type=jnp.float32)

    # AddNorm 1 (dropout prob = 0 -> identity).
    y = _layernorm(attn + x_flat, ln1_g_ref[...], ln1_b_ref[...])

    # Position-wise FFN (bf16 MXU operands, f32 bias/ReLU).
    hidden = jnp.dot(y.astype(jnp.bfloat16), w1_ref[...],
                     preferred_element_type=jnp.float32) + b1_ref[...]
    hidden = jnp.maximum(hidden, 0.0)
    z = jnp.dot(hidden.astype(jnp.bfloat16), w2_ref[...],
                preferred_element_type=jnp.float32) + b2_ref[...]

    # AddNorm 2.
    out = _layernorm(y + z, ln2_g_ref[...], ln2_b_ref[...])
    out_ref[...] = out.reshape(bt, S, H).astype(out_ref.dtype)


def _choose_batch_tile(B, S, max_rows=1024):
    """Largest divisor of B giving Bt*S rows <= max_rows.

    Bt must equal B or be a multiple of 8 so the (Bt, 1) valid_len block
    satisfies the (8, 128) tiling rule on its second-minor dim."""
    cands = [d for d in range(1, B + 1)
             if B % d == 0 and (d == B or d % 8 == 0) and d * S <= max_rows]
    return max(cands) if cands else B


def encoder_block(x, valid_lens, params, num_heads):
    B, S, H = x.shape
    F = params["w1"].shape[1]
    bt = _choose_batch_tile(B, S)
    grid = (B // bt,)

    # Fuse the QKV weights and cast MXU weights to bf16 outside the kernel
    # (halves weight DMA traffic; accumulation stays f32 inside the kernel).
    wqkv = jnp.concatenate([params["wq"], params["wk"], params["wv"]], axis=1)
    bf16 = lambda w: w.astype(jnp.bfloat16)
    vl2d = valid_lens.reshape(B, 1).astype(jnp.int32)

    def const(shape):
        # Constant index map: block is DMA'd once and stays resident across the
        # whole (batch) grid -- no re-fetch per step.
        return pl.BlockSpec(shape, lambda b: (0,) * len(shape))

    kernel = functools.partial(encoder_block_kernel, num_heads=num_heads)
    return pl.pallas_call(
        kernel,
        out_shape=jax.ShapeDtypeStruct((B, S, H), jnp.float32),
        grid=grid,
        in_specs=[
            pl.BlockSpec((bt, S, H), lambda b: (b, 0, 0)),     # x
            pl.BlockSpec((bt, 1), lambda b: (b, 0)),           # valid_lens
            const((H, 3 * H)), const((H, H)),                  # Wqkv, Wo (bf16)
            const((1, H)), const((1, H)),                      # ln1 gamma/beta
            const((H, F)), const((1, F)),                      # ffn dense1
            const((F, H)), const((1, H)),                      # ffn dense2
            const((1, H)), const((1, H)),                      # ln2 gamma/beta
        ],
        out_specs=pl.BlockSpec((bt, S, H), lambda b: (b, 0, 0)),
        # Batch tiles are fully independent -> "parallel" lets v7x shard the
        # grid over both TensorCores (neutral on v5e/v6e).
        # TODO(synk): for production-size H/F, raise vmem_limit_bytes and tile
        # the FFN over F (weights here are tiny so the defaults are fine).
        compiler_params=pltpu.CompilerParams(
            dimension_semantics=("parallel",)),
    )(x, vl2d,
      bf16(wqkv), bf16(params["wo"]),
      params["ln1_g"], params["ln1_b"],
      bf16(params["w1"]), params["b1"],
      bf16(params["w2"]), params["b2"],
      params["ln2_g"], params["ln2_b"])


def transformer_encoder(x, valid_lens, blocks_params, num_heads):
    """Mirrors the stacked attention blocks: returns (X, valid_lens)."""
    if valid_lens is None:
        vl = jnp.full((x.shape[0],), x.shape[1], dtype=jnp.int32)  # no masking
    else:
        vl = valid_lens.astype(jnp.int32)
    for p in blocks_params:
        x = encoder_block(x, vl, p, num_heads)
    return x, valid_lens


# ----------------------------------------------------------------------------
# Deterministic parameter init + matched-precision JAX reference for validation
# ----------------------------------------------------------------------------
def make_block_params(key, H, F):
    ks = jax.random.split(key, 8)
    init = lambda k, shp: jax.random.normal(k, shp, jnp.float32) / math.sqrt(shp[0])
    return dict(
        wq=init(ks[0], (H, H)), wk=init(ks[1], (H, H)),
        wv=init(ks[2], (H, H)), wo=init(ks[3], (H, H)),
        ln1_g=jnp.ones((1, H), jnp.float32), ln1_b=jnp.zeros((1, H), jnp.float32),
        w1=init(ks[4], (H, F)), b1=0.1 * jax.random.normal(ks[5], (1, F), jnp.float32),
        w2=init(ks[6], (F, H)), b2=0.1 * jax.random.normal(ks[7], (1, H), jnp.float32),
        ln2_g=jnp.ones((1, H), jnp.float32), ln2_b=jnp.zeros((1, H), jnp.float32),
    )


def _mm(a, b):
    # Same mixed precision as the kernel: bf16 operands, f32 accumulation.
    return jnp.dot(a.astype(jnp.bfloat16), b.astype(jnp.bfloat16),
                   preferred_element_type=jnp.float32)


def ref_block(x, valid_lens, p, num_heads):
    B, S, H = x.shape
    dh = H // num_heads
    xf = x.reshape(B * S, H)

    def proj(w):
        return _mm(xf, w).reshape(B, S, num_heads, dh).transpose(0, 2, 1, 3)

    q, k, v = proj(p["wq"]), proj(p["wk"]), proj(p["wv"])
    scores = jnp.einsum("bhqd,bhkd->bhqk",
                        q.astype(jnp.bfloat16), k.astype(jnp.bfloat16),
                        preferred_element_type=jnp.float32) / math.sqrt(dh)
    mask = jnp.arange(S)[None, None, None, :] < valid_lens[:, None, None, None]
    scores = jnp.where(mask, scores, -1000000.0)
    w = jax.nn.softmax(scores, axis=-1)
    o = jnp.einsum("bhqk,bhkd->bhqd",
                   w.astype(jnp.bfloat16), v.astype(jnp.bfloat16),
                   preferred_element_type=jnp.float32)
    o = o.transpose(0, 2, 1, 3).reshape(B * S, H)
    attn = _mm(o, p["wo"])
    y = _layernorm(attn + xf, p["ln1_g"], p["ln1_b"])
    z = _mm(jnp.maximum(_mm(y, p["w1"]) + p["b1"], 0.0), p["w2"]) + p["b2"]
    return _layernorm(y + z, p["ln2_g"], p["ln2_b"]).reshape(B, S, H)


if __name__ == "__main__":
    B, S, H, F = 2, 8, 32, 64          # NOTE: production wants H % 128 == 0
    num_heads, num_blks = 2, 2

    key = jax.random.PRNGKey(0)
    kx, kp = jax.random.split(key)
    x = jax.random.normal(kx, (B, S, H), jnp.float32)
    valid_lens = jnp.array([5, 8], dtype=jnp.int32)

    blocks_params = [make_block_params(jax.random.fold_in(kp, i), H, F)
                     for i in range(num_blks)]

    out, vl_out = transformer_encoder(x, valid_lens, blocks_params, num_heads)
    out = jax.block_until_ready(out)

    # Matched-precision (bf16-matmul / f32-accumulate) reference check.
    ref = x
    for p in blocks_params:
        ref = ref_block(ref, valid_lens, p, num_heads)
    assert out.shape == (B, S, H)
    assert jnp.allclose(out, ref, rtol=2e-2, atol=2e-2), "mismatch vs reference"

    print("KERNEL_OK")
</pallas_src>

<mosaic_0001>
module attributes {stable_mosaic.version = 11 : i64} {
  func.func @encoder_block_kernel(%arg0: i32, %arg1: memref<2x8x32xf32, #tpu.memory_space<vmem>>, %arg2: memref<2x1xi32, #tpu.memory_space<vmem>>, %arg3: memref<32x96xbf16, #tpu.memory_space<vmem>>, %arg4: memref<32x32xbf16, #tpu.memory_space<vmem>>, %arg5: memref<1x32xf32, #tpu.memory_space<vmem>>, %arg6: memref<1x32xf32, #tpu.memory_space<vmem>>, %arg7: memref<32x64xbf16, #tpu.memory_space<vmem>>, %arg8: memref<1x64xf32, #tpu.memory_space<vmem>>, %arg9: memref<64x32xbf16, #tpu.memory_space<vmem>>, %arg10: memref<1x32xf32, #tpu.memory_space<vmem>>, %arg11: memref<1x32xf32, #tpu.memory_space<vmem>>, %arg12: memref<1x32xf32, #tpu.memory_space<vmem>>, %arg13: memref<2x8x32xf32, #tpu.memory_space<vmem>>) attributes {dimension_semantics = [#tpu.dimension_semantics<parallel>], iteration_bounds = array<i64: 1>, scalar_prefetch = 0 : i64, scratch_operands = 0 : i64, tpu.core_type = #tpu.core_type<tc>, window_params = [{transform_indices = @transform_0, window_bounds = array<i64: 2, 8, 32>}, {transform_indices = @transform_1, window_bounds = array<i64: 2, 1>}, {pipeline_mode = #tpu.pipeline_mode<synchronous>, transform_indices = @transform_2, window_bounds = array<i64: 32, 96>}, {pipeline_mode = #tpu.pipeline_mode<synchronous>, transform_indices = @transform_3, window_bounds = array<i64: 32, 32>}, {pipeline_mode = #tpu.pipeline_mode<synchronous>, transform_indices = @transform_4, window_bounds = array<i64: 1, 32>}, {pipeline_mode = #tpu.pipeline_mode<synchronous>, transform_indices = @transform_5, window_bounds = array<i64: 1, 32>}, {pipeline_mode = #tpu.pipeline_mode<synchronous>, transform_indices = @transform_6, window_bounds = array<i64: 32, 64>}, {pipeline_mode = #tpu.pipeline_mode<synchronous>, transform_indices = @transform_7, window_bounds = array<i64: 1, 64>}, {pipeline_mode = #tpu.pipeline_mode<synchronous>, transform_indices = @transform_8, window_bounds = array<i64: 64, 32>}, {pipeline_mode = #tpu.pipeline_mode<synchronous>, transform_indices = @transform_9, window_bounds = array<i64: 1, 32>}, {pipeline_mode = #tpu.pipeline_mode<synchronous>, transform_indices = @transform_10, window_bounds = array<i64: 1, 32>}, {pipeline_mode = #tpu.pipeline_mode<synchronous>, transform_indices = @transform_11, window_bounds = array<i64: 1, 32>}, {transform_indices = @transform_12, window_bounds = array<i64: 2, 8, 32>}]} {
    %c0 = arith.constant 0 : index
    %c0_0 = arith.constant 0 : index
    %c0_1 = arith.constant 0 : index
    %0 = vector.load %arg1[%c0, %c0_0, %c0_1] : memref<2x8x32xf32, #tpu.memory_space<vmem>>, vector<2x8x32xf32>
    %1 = vector.shape_cast %0 : vector<2x8x32xf32> to vector<16x32xf32>
    %2 = arith.truncf %1 : vector<16x32xf32> to vector<16x32xbf16>
    %c0_2 = arith.constant 0 : index
    %c0_3 = arith.constant 0 : index
    %3 = vector.load %arg3[%c0_2, %c0_3] : memref<32x96xbf16, #tpu.memory_space<vmem>>, vector<32x96xbf16>
    %cst = arith.constant dense<0.000000e+00> : vector<16x96xf32>
    %4 = tpu.matmul %2, %3, %cst {dimension_numbers = #tpu.dot_dimension_numbers<[1], [0], [0], [1], [0, 0, 1, 1], [], []>} : vector<16x32xbf16>, vector<32x96xbf16>, vector<16x96xf32> -> vector<16x96xf32>
    %5 = arith.truncf %4 : vector<16x96xf32> to vector<16x96xbf16>
    %6 = vector.extract_strided_slice %5 {offsets = [0, 0], sizes = [16, 32], strides = [1, 1]} : vector<16x96xbf16> to vector<16x32xbf16>
    %7 = vector.shape_cast %6 : vector<16x32xbf16> to vector<2x8x32xbf16>
    %8 = vector.extract_strided_slice %5 {offsets = [0, 32], sizes = [16, 32], strides = [1, 1]} : vector<16x96xbf16> to vector<16x32xbf16>
    %9 = vector.shape_cast %8 : vector<16x32xbf16> to vector<2x8x32xbf16>
    %10 = vector.extract_strided_slice %5 {offsets = [0, 64], sizes = [16, 32], strides = [1, 1]} : vector<16x96xbf16> to vector<16x32xbf16>
    %11 = vector.shape_cast %10 : vector<16x32xbf16> to vector<2x8x32xbf16>
    %c0_4 = arith.constant 0 : index
    %c0_5 = arith.constant 0 : index
    %12 = vector.load %arg2[%c0_4, %c0_5] : memref<2x1xi32, #tpu.memory_space<vmem>>, vector<2x1xi32>
    %13 = tpu.iota {dimensions = array<i32: 2>} : vector<2x1x8xi32>
    %14 = vector.shape_cast %12 : vector<2x1xi32> to vector<2x1x1xi32>
    %15 = vector.broadcast %14 : vector<2x1x1xi32> to vector<2x1x8xi32>
    %16 = arith.cmpi slt, %13, %15 : vector<2x1x8xi32>
    %17 = vector.extract_strided_slice %7 {offsets = [0, 0, 0], sizes = [2, 8, 16], strides = [1, 1, 1]} : vector<2x8x32xbf16> to vector<2x8x16xbf16>
    %18 = vector.extract_strided_slice %9 {offsets = [0, 0, 0], sizes = [2, 8, 16], strides = [1, 1, 1]} : vector<2x8x32xbf16> to vector<2x8x16xbf16>
    %19 = vector.extract_strided_slice %11 {offsets = [0, 0, 0], sizes = [2, 8, 16], strides = [1, 1, 1]} : vector<2x8x32xbf16> to vector<2x8x16xbf16>
    "tpu.trace_start"() <{level = 10 : i32, message = "bqd,bkd->bqk"}> : () -> ()
    %cst_6 = arith.constant dense<0.000000e+00> : vector<2x8x8xf32>
    %20 = tpu.matmul %17, %18, %cst_6 {dimension_numbers = #tpu.dot_dimension_numbers<[2], [2], [1], [1], [0, 0, 0, 1, 1, 1], [0], [0]>} : vector<2x8x16xbf16>, vector<2x8x16xbf16>, vector<2x8x8xf32> -> vector<2x8x8xf32>
    "tpu.trace_stop"() : () -> ()
    %cst_7 = arith.constant 2.500000e-01 : f32
    %21 = vector.broadcast %cst_7 : f32 to vector<2x8x8xf32>
    %22 = arith.mulf %20, %21 : vector<2x8x8xf32>
    %cst_8 = arith.constant -1.000000e+06 : f32
    %23 = vector.shape_cast %16 : vector<2x1x8xi1> to vector<2x1x8xi1>
    %24 = vector.broadcast %23 : vector<2x1x8xi1> to vector<2x8x8xi1>
    %25 = vector.broadcast %cst_8 : f32 to vector<2x8x8xf32>
    %26 = arith.select %24, %22, %25 : vector<2x8x8xi1>, vector<2x8x8xf32>
    %cst_9 = arith.constant dense<0xFF800000> : vector<2x8xf32>
    %27 = vector.multi_reduction <maximumf>, %26, %cst_9 [2] : vector<2x8x8xf32> to vector<2x8xf32>
    %28 = vector.shape_cast %27 : vector<2x8xf32> to vector<2x8x1xf32>
    %29 = vector.broadcast %28 : vector<2x8x1xf32> to vector<2x8x8xf32>
    %30 = arith.subf %26, %29 : vector<2x8x8xf32>
    %31 = math.exp %30 : vector<2x8x8xf32>
    %cst_10 = arith.constant dense<0.000000e+00> : vector<2x8xf32>
    %32 = vector.multi_reduction <add>, %31, %cst_10 [2] : vector<2x8x8xf32> to vector<2x8xf32>
    %33 = vector.shape_cast %32 : vector<2x8xf32> to vector<2x8x1xf32>
    %34 = tpu.reciprocal %33 {approx = true} : vector<2x8x1xf32> -> vector<2x8x1xf32>
    %35 = vector.broadcast %34 : vector<2x8x1xf32> to vector<2x8x8xf32>
    %36 = arith.mulf %31, %35 : vector<2x8x8xf32>
    %37 = arith.truncf %36 : vector<2x8x8xf32> to vector<2x8x8xbf16>
    "tpu.trace_start"() <{level = 10 : i32, message = "bqk,bkd->bqd"}> : () -> ()
    %cst_11 = arith.constant dense<0.000000e+00> : vector<2x8x16xf32>
    %38 = tpu.matmul %37, %19, %cst_11 {dimension_numbers = #tpu.dot_dimension_numbers<[2], [1], [1], [2], [0, 0, 0, 1, 1, 2], [0], [0]>} : vector<2x8x8xbf16>, vector<2x8x16xbf16>, vector<2x8x16xf32> -> vector<2x8x16xf32>
    "tpu.trace_stop"() : () -> ()
    %39 = vector.extract_strided_slice %7 {offsets = [0, 0, 16], sizes = [2, 8, 16], strides = [1, 1, 1]} : vector<2x8x32xbf16> to vector<2x8x16xbf16>
    %40 = vector.extract_strided_slice %9 {offsets = [0, 0, 16], sizes = [2, 8, 16], strides = [1, 1, 1]} : vector<2x8x32xbf16> to vector<2x8x16xbf16>
    %41 = vector.extract_strided_slice %11 {offsets = [0, 0, 16], sizes = [2, 8, 16], strides = [1, 1, 1]} : vector<2x8x32xbf16> to vector<2x8x16xbf16>
    "tpu.trace_start"() <{level = 10 : i32, message = "bqd,bkd->bqk"}> : () -> ()
    %cst_12 = arith.constant dense<0.000000e+00> : vector<2x8x8xf32>
    %42 = tpu.matmul %39, %40, %cst_12 {dimension_numbers = #tpu.dot_dimension_numbers<[2], [2], [1], [1], [0, 0, 0, 1, 1, 1], [0], [0]>} : vector<2x8x16xbf16>, vector<2x8x16xbf16>, vector<2x8x8xf32> -> vector<2x8x8xf32>
    "tpu.trace_stop"() : () -> ()
    %cst_13 = arith.constant 2.500000e-01 : f32
    %43 = vector.broadcast %cst_13 : f32 to vector<2x8x8xf32>
    %44 = arith.mulf %42, %43 : vector<2x8x8xf32>
    %cst_14 = arith.constant -1.000000e+06 : f32
    %45 = vector.shape_cast %16 : vector<2x1x8xi1> to vector<2x1x8xi1>
    %46 = vector.broadcast %45 : vector<2x1x8xi1> to vector<2x8x8xi1>
    %47 = vector.broadcast %cst_14 : f32 to vector<2x8x8xf32>
    %48 = arith.select %46, %44, %47 : vector<2x8x8xi1>, vector<2x8x8xf32>
    %cst_15 = arith.constant dense<0xFF800000> : vector<2x8xf32>
    %49 = vector.multi_reduction <maximumf>, %48, %cst_15 [2] : vector<2x8x8xf32> to vector<2x8xf32>
    %50 = vector.shape_cast %49 : vector<2x8xf32> to vector<2x8x1xf32>
    %51 = vector.broadcast %50 : vector<2x8x1xf32> to vector<2x8x8xf32>
    %52 = arith.subf %48, %51 : vector<2x8x8xf32>
    %53 = math.exp %52 : vector<2x8x8xf32>
    %cst_16 = arith.constant dense<0.000000e+00> : vector<2x8xf32>
    %54 = vector.multi_reduction <add>, %53, %cst_16 [2] : vector<2x8x8xf32> to vector<2x8xf32>
    %55 = vector.shape_cast %54 : vector<2x8xf32> to vector<2x8x1xf32>
    %56 = tpu.reciprocal %55 {approx = true} : vector<2x8x1xf32> -> vector<2x8x1xf32>
    %57 = vector.broadcast %56 : vector<2x8x1xf32> to vector<2x8x8xf32>
    %58 = arith.mulf %53, %57 : vector<2x8x8xf32>
    %59 = arith.truncf %58 : vector<2x8x8xf32> to vector<2x8x8xbf16>
    "tpu.trace_start"() <{level = 10 : i32, message = "bqk,bkd->bqd"}> : () -> ()
    %cst_17 = arith.constant dense<0.000000e+00> : vector<2x8x16xf32>
    %60 = tpu.matmul %59, %41, %cst_17 {dimension_numbers = #tpu.dot_dimension_numbers<[2], [1], [1], [2], [0, 0, 0, 1, 1, 2], [0], [0]>} : vector<2x8x8xbf16>, vector<2x8x16xbf16>, vector<2x8x16xf32> -> vector<2x8x16xf32>
    "tpu.trace_stop"() : () -> ()
    %61 = tpu.concatenate %38, %60 in 2 : vector<2x8x16xf32>, vector<2x8x16xf32> -> vector<2x8x32xf32>
    %62 = vector.shape_cast %61 : vector<2x8x32xf32> to vector<16x32xf32>
    %63 = arith.truncf %62 : vector<16x32xf32> to vector<16x32xbf16>
    %c0_18 = arith.constant 0 : index
    %c0_19 = arith.constant 0 : index
    %64 = vector.load %arg4[%c0_18, %c0_19] : memref<32x32xbf16, #tpu.memory_space<vmem>>, vector<32x32xbf16>
    %cst_20 = arith.constant dense<0.000000e+00> : vector<16x32xf32>
    %65 = tpu.matmul %63, %64, %cst_20 {dimension_numbers = #tpu.dot_dimension_numbers<[1], [0], [0], [1], [0, 0, 1, 1], [], []>} : vector<16x32xbf16>, vector<32x32xbf16>, vector<16x32xf32> -> vector<16x32xf32>
    %66 = arith.addf %65, %1 : vector<16x32xf32>
    %c0_21 = arith.constant 0 : index
    %c0_22 = arith.constant 0 : index
    %67 = vector.load %arg5[%c0_21, %c0_22] : memref<1x32xf32, #tpu.memory_space<vmem>>, vector<1x32xf32>
    %c0_23 = arith.constant 0 : index
    %c0_24 = arith.constant 0 : index
    %68 = vector.load %arg6[%c0_23, %c0_24] : memref<1x32xf32, #tpu.memory_space<vmem>>, vector<1x32xf32>
    %cst_25 = arith.constant dense<0.000000e+00> : vector<16xf32>
    %69 = vector.multi_reduction <add>, %66, %cst_25 [1] : vector<16x32xf32> to vector<16xf32>
    %70 = vector.shape_cast %69 : vector<16xf32> to vector<16x1xf32>
    %cst_26 = arith.constant 3.200000e+01 : f32
    %71 = vector.broadcast %cst_26 : f32 to vector<16x1xf32>
    %72 = arith.divf %70, %71 : vector<16x1xf32>
    %73 = vector.broadcast %72 : vector<16x1xf32> to vector<16x32xf32>
    %74 = arith.subf %66, %73 : vector<16x32xf32>
    %75 = arith.mulf %74, %74 : vector<16x32xf32>
    %cst_27 = arith.constant dense<0.000000e+00> : vector<16xf32>
    %76 = vector.multi_reduction <add>, %75, %cst_27 [1] : vector<16x32xf32> to vector<16xf32>
    %77 = vector.shape_cast %76 : vector<16xf32> to vector<16x1xf32>
    %cst_28 = arith.constant 3.200000e+01 : f32
    %78 = vector.broadcast %cst_28 : f32 to vector<16x1xf32>
    %79 = arith.divf %77, %78 : vector<16x1xf32>
    %80 = vector.broadcast %72 : vector<16x1xf32> to vector<16x32xf32>
    %81 = arith.subf %66, %80 : vector<16x32xf32>
    %cst_29 = arith.constant 9.99999974E-6 : f32
    %82 = vector.broadcast %cst_29 : f32 to vector<16x1xf32>
    %83 = arith.addf %79, %82 : vector<16x1xf32>
    %84 = math.rsqrt %83 : vector<16x1xf32>
    %85 = vector.broadcast %84 : vector<16x1xf32> to vector<16x32xf32>
    %86 = arith.mulf %81, %85 : vector<16x32xf32>
    %87 = vector.broadcast %67 : vector<1x32xf32> to vector<16x32xf32>
    %88 = arith.mulf %86, %87 : vector<16x32xf32>
    %89 = vector.broadcast %68 : vector<1x32xf32> to vector<16x32xf32>
    %90 = arith.addf %88, %89 : vector<16x32xf32>
    %91 = arith.truncf %90 : vector<16x32xf32> to vector<16x32xbf16>
    %c0_30 = arith.constant 0 : index
    %c0_31 = arith.constant 0 : index
    %92 = vector.load %arg7[%c0_30, %c0_31] : memref<32x64xbf16, #tpu.memory_space<vmem>>, vector<32x64xbf16>
    %cst_32 = arith.constant dense<0.000000e+00> : vector<16x64xf32>
    %93 = tpu.matmul %91, %92, %cst_32 {dimension_numbers = #tpu.dot_dimension_numbers<[1], [0], [0], [1], [0, 0, 1, 1], [], []>} : vector<16x32xbf16>, vector<32x64xbf16>, vector<16x64xf32> -> vector<16x64xf32>
    %c0_33 = arith.constant 0 : index
    %c0_34 = arith.constant 0 : index
    %94 = vector.load %arg8[%c0_33, %c0_34] : memref<1x64xf32, #tpu.memory_space<vmem>>, vector<1x64xf32>
    %95 = vector.broadcast %94 : vector<1x64xf32> to vector<16x64xf32>
    %96 = arith.addf %93, %95 : vector<16x64xf32>
    %cst_35 = arith.constant 0.000000e+00 : f32
    %97 = vector.broadcast %cst_35 : f32 to vector<16x64xf32>
    %98 = arith.maximumf %96, %97 : vector<16x64xf32>
    %99 = arith.truncf %98 : vector<16x64xf32> to vector<16x64xbf16>
    %c0_36 = arith.constant 0 : index
    %c0_37 = arith.constant 0 : index
    %100 = vector.load %arg9[%c0_36, %c0_37] : memref<64x32xbf16, #tpu.memory_space<vmem>>, vector<64x32xbf16>
    %cst_38 = arith.constant dense<0.000000e+00> : vector<16x32xf32>
    %101 = tpu.matmul %99, %100, %cst_38 {dimension_numbers = #tpu.dot_dimension_numbers<[1], [0], [0], [1], [0, 0, 1, 1], [], []>} : vector<16x64xbf16>, vector<64x32xbf16>, vector<16x32xf32> -> vector<16x32xf32>
    %c0_39 = arith.constant 0 : index
    %c0_40 = arith.constant 0 : index
    %102 = vector.load %arg10[%c0_39, %c0_40] : memref<1x32xf32, #tpu.memory_space<vmem>>, vector<1x32xf32>
    %103 = vector.broadcast %102 : vector<1x32xf32> to vector<16x32xf32>
    %104 = arith.addf %101, %103 : vector<16x32xf32>
    %105 = arith.addf %90, %104 : vector<16x32xf32>
    %c0_41 = arith.constant 0 : index
    %c0_42 = arith.constant 0 : index
    %106 = vector.load %arg11[%c0_41, %c0_42] : memref<1x32xf32, #tpu.memory_space<vmem>>, vector<1x32xf32>
    %c0_43 = arith.constant 0 : index
    %c0_44 = arith.constant 0 : index
    %107 = vector.load %arg12[%c0_43, %c0_44] : memref<1x32xf32, #tpu.memory_space<vmem>>, vector<1x32xf32>
    %cst_45 = arith.constant dense<0.000000e+00> : vector<16xf32>
    %108 = vector.multi_reduction <add>, %105, %cst_45 [1] : vector<16x32xf32> to vector<16xf32>
    %109 = vector.shape_cast %108 : vector<16xf32> to vector<16x1xf32>
    %cst_46 = arith.constant 3.200000e+01 : f32
    %110 = vector.broadcast %cst_46 : f32 to vector<16x1xf32>
    %111 = arith.divf %109, %110 : vector<16x1xf32>
    %112 = vector.broadcast %111 : vector<16x1xf32> to vector<16x32xf32>
    %113 = arith.subf %105, %112 : vector<16x32xf32>
    %114 = arith.mulf %113, %113 : vector<16x32xf32>
    %cst_47 = arith.constant dense<0.000000e+00> : vector<16xf32>
    %115 = vector.multi_reduction <add>, %114, %cst_47 [1] : vector<16x32xf32> to vector<16xf32>
    %116 = vector.shape_cast %115 : vector<16xf32> to vector<16x1xf32>
    %cst_48 = arith.constant 3.200000e+01 : f32
    %117 = vector.broadcast %cst_48 : f32 to vector<16x1xf32>
    %118 = arith.divf %116, %117 : vector<16x1xf32>
    %119 = vector.broadcast %111 : vector<16x1xf32> to vector<16x32xf32>
    %120 = arith.subf %105, %119 : vector<16x32xf32>
    %cst_49 = arith.constant 9.99999974E-6 : f32
    %121 = vector.broadcast %cst_49 : f32 to vector<16x1xf32>
    %122 = arith.addf %118, %121 : vector<16x1xf32>
    %123 = math.rsqrt %122 : vector<16x1xf32>
    %124 = vector.broadcast %123 : vector<16x1xf32> to vector<16x32xf32>
    %125 = arith.mulf %120, %124 : vector<16x32xf32>
    %126 = vector.broadcast %106 : vector<1x32xf32> to vector<16x32xf32>
    %127 = arith.mulf %125, %126 : vector<16x32xf32>
    %128 = vector.broadcast %107 : vector<1x32xf32> to vector<16x32xf32>
    %129 = arith.addf %127, %128 : vector<16x32xf32>
    %130 = vector.shape_cast %129 : vector<16x32xf32> to vector<2x8x32xf32>
    %c0_50 = arith.constant 0 : index
    %c0_51 = arith.constant 0 : index
    %c0_52 = arith.constant 0 : index
    %131 = vector.load %arg13[%c0_50, %c0_51, %c0_52] : memref<2x8x32xf32, #tpu.memory_space<vmem>>, vector<2x8x32xf32>
    tpu.vector_store %arg13[%c0_50, %c0_51, %c0_52], %130 {strides = array<i32>} : memref<2x8x32xf32, #tpu.memory_space<vmem>>, vector<2x8x32xf32>,
    return
  }
  func.func @transform_0(%arg0: i32) -> (i32, i32, i32) {
    %c0_i32 = arith.constant 0 : i32
    %c0_i32_0 = arith.constant 0 : i32
    %c0_i32_1 = arith.constant 0 : i32
    return %arg0, %c0_i32, %c0_i32_0 : i32, i32, i32
  }
  func.func @transform_1(%arg0: i32) -> (i32, i32) {
    %c0_i32 = arith.constant 0 : i32
    %c0_i32_0 = arith.constant 0 : i32
    return %arg0, %c0_i32 : i32, i32
  }
  func.func @transform_2(%arg0: i32) -> (i32, i32) {
    %c0_i32 = arith.constant 0 : i32
    %c0_i32_0 = arith.constant 0 : i32
    %c0_i32_1 = arith.constant 0 : i32
    return %c0_i32, %c0_i32_0 : i32, i32
  }
  func.func @transform_3(%arg0: i32) -> (i32, i32) {
    %c0_i32 = arith.constant 0 : i32
    %c0_i32_0 = arith.constant 0 : i32
    %c0_i32_1 = arith.constant 0 : i32
    return %c0_i32, %c0_i32_0 : i32, i32
  }
  func.func @transform_4(%arg0: i32) -> (i32, i32) {
    %c0_i32 = arith.constant 0 : i32
    %c0_i32_0 = arith.constant 0 : i32
    %c0_i32_1 = arith.constant 0 : i32
    return %c0_i32, %c0_i32_0 : i32, i32
  }
  func.func @transform_5(%arg0: i32) -> (i32, i32) {
    %c0_i32 = arith.constant 0 : i32
    %c0_i32_0 = arith.constant 0 : i32
    %c0_i32_1 = arith.constant 0 : i32
    return %c0_i32, %c0_i32_0 : i32, i32
  }
  func.func @transform_6(%arg0: i32) -> (i32, i32) {
    %c0_i32 = arith.constant 0 : i32
    %c0_i32_0 = arith.constant 0 : i32
    %c0_i32_1 = arith.constant 0 : i32
    return %c0_i32, %c0_i32_0 : i32, i32
  }
  func.func @transform_7(%arg0: i32) -> (i32, i32) {
    %c0_i32 = arith.constant 0 : i32
    %c0_i32_0 = arith.constant 0 : i32
    %c0_i32_1 = arith.constant 0 : i32
    return %c0_i32, %c0_i32_0 : i32, i32
  }
  func.func @transform_8(%arg0: i32) -> (i32, i32) {
    %c0_i32 = arith.constant 0 : i32
    %c0_i32_0 = arith.constant 0 : i32
    %c0_i32_1 = arith.constant 0 : i32
    return %c0_i32, %c0_i32_0 : i32, i32
  }
  func.func @transform_9(%arg0: i32) -> (i32, i32) {
    %c0_i32 = arith.constant 0 : i32
    %c0_i32_0 = arith.constant 0 : i32
    %c0_i32_1 = arith.constant 0 : i32
    return %c0_i32, %c0_i32_0 : i32, i32
  }
  func.func @transform_10(%arg0: i32) -> (i32, i32) {
    %c0_i32 = arith.constant 0 : i32
    %c0_i32_0 = arith.constant 0 : i32
    %c0_i32_1 = arith.constant 0 : i32
    return %c0_i32, %c0_i32_0 : i32, i32
  }
  func.func @transform_11(%arg0: i32) -> (i32, i32) {
    %c0_i32 = arith.constant 0 : i32
    %c0_i32_0 = arith.constant 0 : i32
    %c0_i32_1 = arith.constant 0 : i32
    return %c0_i32, %c0_i32_0 : i32, i32
  }
  func.func @transform_12(%arg0: i32) -> (i32, i32, i32) {
    %c0_i32 = arith.constant 0 : i32
    %c0_i32_0 = arith.constant 0 : i32
    %c0_i32_1 = arith.constant 0 : i32
    return %arg0, %c0_i32, %c0_i32_0 : i32, i32, i32
  }
}

</mosaic_0001>

<llo_original>
// kernel: tpu_custom_call.1
$region0: #{tpu_custom_call.1}
  #allocation0 [shape = 'u32[]', space=smem, size = 0x4, offset = 0x4, fixed_abs, tag = 'smem constant byte address 0x4 - core index']
  #allocation1 [shape = 'u32[144,128]{1,0:T(1,128)}', space=vmem, size = 0x12000, scoped, tag = 'internal scratch']
  %s0 = inlined_call_operand.vmem [shape: f32[2,8,32], index: 0, kind: input, shape index: {}]
  %s1 = inlined_call_operand.vmem [shape: s32[2,1], index: 1, kind: input, shape index: {}]
  %s2 = inlined_call_operand.vmem [shape: bf16[32,96], index: 2, kind: input, shape index: {}]
  %s3 = inlined_call_operand.vmem [shape: bf16[32,32], index: 3, kind: input, shape index: {}]
  %s4 = inlined_call_operand.vmem [shape: f32[1,32], index: 4, kind: input, shape index: {}]
  %s5 = inlined_call_operand.hbm [shape: f32[1,32], index: 5, kind: input, shape index: {}]
  %s6 = inlined_call_operand.hbm [shape: bf16[32,64], index: 6, kind: input, shape index: {}]
  %s7 = inlined_call_operand.hbm [shape: f32[1,64], index: 7, kind: input, shape index: {}]
  %s8 = inlined_call_operand.vmem [shape: bf16[64,32], index: 8, kind: input, shape index: {}]
  %s9 = inlined_call_operand.vmem [shape: f32[1,32], index: 9, kind: input, shape index: {}]
  %s10 = inlined_call_operand.vmem [shape: f32[1,32], index: 10, kind: input, shape index: {}]
  %s11 = inlined_call_operand.vmem [shape: f32[1,32], index: 11, kind: input, shape index: {}]
  %s12 = inlined_call_operand.hbm [shape: f32[2,8,32], index: 12, kind: output, shape index: {}]
  %s13 = sld [smem:[#allocation0]]
  $region70: #{tpu_custom_call.1} parent=0
    _
  %s15 = ssub.s32 1, %s13
  %s16 = scalar_select 0, %s15, %s13
  $region1: #{tpu_custom_call.1} parent=0
    #allocation2 [shape = 'u8[512]{0}', space=vmem, size = 0x400, scoped, tag = 'input window, operand 5, single buffered']
    #allocation3 [shape = 's32[1]{0}', space=sflag, size = 0x4, scoped, tag = 'scoped memory for tpu_custom_call.1']
    #allocation4 [shape = 's32[1]{0}', space=sflag, size = 0x4, scoped, tag = 'scoped memory for tpu_custom_call.1']
    #allocation5 [shape = 'u8[8192]{0}', space=vmem, size = 0x2000, scoped, tag = 'input window, operand 6, single buffered']
    #allocation6 [shape = 's32[1]{0}', space=sflag, size = 0x4, scoped, tag = 'scoped memory for tpu_custom_call.1']
    #allocation7 [shape = 'u8[512]{0}', space=vmem, size = 0x400, scoped, tag = 'input window, operand 7, single buffered']
    #allocation8 [shape = 'u8[8192]{0}', space=vmem, size = 0x2000, scoped, tag = 'output window, operand 0, single buffered']
    %17 = vsyncpa [#allocation3], 0
    %18 = vsyncpa [#allocation6], 0
    %19 = vsyncpa [#allocation4], 0
    // Predicated region
    $region2: #{tpu_custom_call.1} parent=1 // pred_check
      _
    $region3: #{tpu_custom_call.1} parent=1 // pred_check_branch
      %21 = sbr.rel (0) target = $region5
    $region4: #{tpu_custom_call.1} parent=1 // pred_region
      _
    $region5: #{tpu_custom_call.1} parent=1 // pred_fallthru
      _
    // Predicated region
    $region6: #{tpu_custom_call.1} parent=1 // pred_check
      _
    $region7: #{tpu_custom_call.1} parent=1 // pred_check_branch
      %23 = sbr.rel (0) target = $region9
    $region8: #{tpu_custom_call.1} parent=1 // pred_region
      _
    $region9: #{tpu_custom_call.1} parent=1 // pred_fallthru
      _
    // Predicated region
    $region10: #{tpu_custom_call.1} parent=1 // pred_check
      _
    $region11: #{tpu_custom_call.1} parent=1 // pred_check_branch
      %25 = sbr.rel (0) target = $region13
    $region12: #{tpu_custom_call.1} parent=1 // pred_region
      _
    $region13: #{tpu_custom_call.1} parent=1 // pred_fallthru
      _
    // Predicated region
    $region14: #{tpu_custom_call.1} parent=1 // pred_check
      _
    $region15: #{tpu_custom_call.1} parent=1 // pred_check_branch
      %27 = sbr.rel (0) target = $region17
    $region16: #{tpu_custom_call.1} parent=1 // pred_region
      _
    $region17: #{tpu_custom_call.1} parent=1 // pred_fallthru
      _
    // Predicated region
    $region18: #{tpu_custom_call.1} parent=1 // pred_check
      _
    $region19: #{tpu_custom_call.1} parent=1 // pred_check_branch
      %29 = sbr.rel (0) target = $region21
    $region20: #{tpu_custom_call.1} parent=1 // pred_region
      _
    $region21: #{tpu_custom_call.1} parent=1 // pred_fallthru
      _
    // Predicated region
    $region22: #{tpu_custom_call.1} parent=1 // pred_check
      _
    $region23: #{tpu_custom_call.1} parent=1 // pred_check_branch
      %31 = sbr.rel (0) target = $region25
    $region24: #{tpu_custom_call.1} parent=1 // pred_region
      %s33 = ssub.s32 16, 16
      %34 = vsyncadd [#allocation3], %s33
      %s36 = sshll.u32 [#allocation2], 4
      %s37 = int_to_ptr.vmem [resolvable:$true] %s36
      %39 = dma.hbm_to_vmem [thread:$0]  %s5, 16, %s37, [#allocation3]
    $region25: #{tpu_custom_call.1} parent=1 // pred_fallthru
      _
    // Predicated region
    $region26: #{tpu_custom_call.1} parent=1 // pred_check
      _
    $region27: #{tpu_custom_call.1} parent=1 // pred_check_branch
      %41 = sbr.rel (0) target = $region29
    $region28: #{tpu_custom_call.1} parent=1 // pred_region
      %s43 = ssub.s32 256, 256
      %44 = vsyncadd [#allocation6], %s43
      %s45 = sshll.u32 [#allocation5], 4
      %s46 = int_to_ptr.vmem [resolvable:$true] %s45
      %51 = dma.hbm_to_vmem [thread:$0]  %s6, 256, %s46, [#allocation6], 64, 64, 4
    $region29: #{tpu_custom_call.1} parent=1 // pred_fallthru
      _
    // Predicated region
    $region30: #{tpu_custom_call.1} parent=1 // pred_check
      _
    $region31: #{tpu_custom_call.1} parent=1 // pred_check_branch
      %53 = sbr.rel (0) target = $region33
    $region32: #{tpu_custom_call.1} parent=1 // pred_region
      %s55 = ssub.s32 16, 16
      %56 = vsyncadd [#allocation6], %s55
      %s58 = sshll.u32 [#allocation7], 4
      %s59 = int_to_ptr.vmem [resolvable:$true] %s58
      %61 = dma.hbm_to_vmem [thread:$0]  %s7, 16, %s59, [#allocation6]
    $region33: #{tpu_custom_call.1} parent=1 // pred_fallthru
      _
    // Predicated region
    $region34: #{tpu_custom_call.1} parent=1 // pred_check
      _
    $region35: #{tpu_custom_call.1} parent=1 // pred_check_branch
      %63 = sbr.rel (0) target = $region37
    $region36: #{tpu_custom_call.1} parent=1 // pred_region
      _
    $region37: #{tpu_custom_call.1} parent=1 // pred_fallthru
      _
    // Predicated region
    $region38: #{tpu_custom_call.1} parent=1 // pred_check
      _
    $region39: #{tpu_custom_call.1} parent=1 // pred_check_branch
      %65 = sbr.rel (0) target = $region41
    $region40: #{tpu_custom_call.1} parent=1 // pred_region
      _
    $region41: #{tpu_custom_call.1} parent=1 // pred_fallthru
      _
    // Predicated region
    $region42: #{tpu_custom_call.1} parent=1 // pred_check
      _
    $region43: #{tpu_custom_call.1} parent=1 // pred_check_branch
      %67 = sbr.rel (0) target = $region45
    $region44: #{tpu_custom_call.1} parent=1 // pred_region
      _
    $region45: #{tpu_custom_call.1} parent=1 // pred_fallthru
      _
    // Predicated region
    $region46: #{tpu_custom_call.1} parent=1 // pred_check
      _
    $region47: #{tpu_custom_call.1} parent=1 // pred_check_branch
      %69 = sbr.rel (0) target = $region49
    $region48: #{tpu_custom_call.1} parent=1 // pred_region
      _
    $region49: #{tpu_custom_call.1} parent=1 // pred_fallthru
      _
    // Predicated region
    $region50: #{tpu_custom_call.1} parent=1 // pred_check
      _
    $region51: #{tpu_custom_call.1} parent=1 // pred_check_branch
      %71 = sbr.rel (0) target = $region53
    $region52: #{tpu_custom_call.1} parent=1 // pred_region
      %72 = dma.done [#allocation3], 16
    $region53: #{tpu_custom_call.1} parent=1 // pred_fallthru
      _
    // Predicated region
    $region54: #{tpu_custom_call.1} parent=1 // pred_check
      _
    $region55: #{tpu_custom_call.1} parent=1 // pred_check_branch
      %74 = sbr.rel (0) target = $region57
    $region56: #{tpu_custom_call.1} parent=1 // pred_region
      %75 = dma.done [#allocation6], 256
    $region57: #{tpu_custom_call.1} parent=1 // pred_fallthru
      _
    // Predicated region
    $region58: #{tpu_custom_call.1} parent=1 // pred_check
      _
    $region59: #{tpu_custom_call.1} parent=1 // pred_check_branch
      %77 = sbr.rel (0) target = $region61
    $region60: #{tpu_custom_call.1} parent=1 // pred_region
      %78 = dma.done [#allocation6], 16
    $region61: #{tpu_custom_call.1} parent=1 // pred_fallthru
      _
    %v80 = vld [vmem:[%s0] sm:$0xff]
    %v81 = vld [vmem:[%s0 + $0x8] sm:$0xff]
    %v82 = vpack.c.bf16 %v81, %v80
    %v83 = vld [vmem:[%s2] sm:$0xf]
    %v84 = vld [vmem:[%s2 + $0x4] sm:$0xf]
    %v85 = vld [vmem:[%s2 + $0x8] sm:$0xf]
    %v86 = vld [vmem:[%s2 + $0xc] sm:$0xf]
    %v91 = vunpack.c.l.b16 %v83
    %v92 = vunpack.c.l.b16 %v84
    %v93 = vunpack.c.l.b16 %v85
    %v94 = vunpack.c.l.b16 %v86
    %v95 = vpack.c.b16 %v92, %v91
    %v96 = vpack.c.b16 %v94, %v93
    %vm99 = vcmask 261120
    %v101 = vsel %vm99, %v82, 0
    %103 = vmatprep.subr.bf16.mxu0 0
    %104 = vmatpush1.bf16.msra.mxu0 0
    %105 = vmatprep.subr.bf16.mxu0 0
    %106 = vmatpush1.bf16.msra.mxu0 0
    %107 = vmatprep.subr.bf16.mxu0 0
    %108 = vmatpush1.bf16.msra.mxu0 0
    %109 = vmatprep.subr.bf16.mxu0 0
    %110 = vmatpush1.bf16.msra.mxu0 0
    %111 = vmatprep.subr.bf16.mxu0 0
    %112 = vmatpush1.bf16.msra.mxu0 0
    %113 = vmatprep.subr.bf16.mxu0 0
    %114 = vmatpush1.bf16.msra.mxu0 0
    %115 = vmatprep.subr.bf16.mxu0 0
    %116 = vmatpush1.bf16.msra.mxu0 %v96
    %117 = vmatprep.subr.bf16.mxu0 0
    %118 = vmatpush1.bf16.msra.mxu0 %v95
    %119 = vmatprep.subr.bf16.mxu0 0
    %120 = vmatpush2.bf16.msra.mxu0 0
    %121 = vmatprep.subr.bf16.mxu0 0
    %122 = vmatpush2.bf16.msra.mxu0 0
    %123 = vmatprep.subr.bf16.mxu0 0
    %124 = vmatpush2.bf16.msra.mxu0 0
    %125 = vmatprep.subr.bf16.mxu0 0
    %126 = vmatpush2.bf16.msra.mxu0 0
    %127 = vmatprep.subr.bf16.mxu0 0
    %128 = vmatpush2.bf16.msra.mxu0 0
    %129 = vmatprep.subr.bf16.mxu0 0
    %130 = vmatpush2.bf16.msra.mxu0 0
    %131 = vmatprep.subr.bf16.mxu0 0
    %132 = vmatpush2.bf16.msra.mxu0 0
    %133 = vmatprep.subr.bf16.mxu0 0
    %134 = vmatpush2.bf16.msra.mxu0 0
    %135 = vmatprep.mubr.bf16.mxu0 0
    %136 = vmatmul.mubr.bf16.gmra.mxu0 %v101
    %v137 = vpop.f32.mrf.mxu0
    %v138 = vadd.f32 0.0, %v137
    %v139 = vpop.f32.mrf.mxu0
    %v140 = vpop.f32.mrf.mxu0
    %v141 = vadd.f32 0.0, %v140
    %v142 = vpop.f32.mrf.mxu0
    %143 = vdwg.mxu0
    %v144 = vpack.c.bf16 %v141, %v138
    %v146 = vunpack.c.l.b16 %v144
    %v147 = vunpack.c.h.b16 %v144
    %v148 = vpack.c.b16 %v146, %v146
    %v149 = vpack.c.b16 %v147, %v147
    %v150 = vld [vmem:[%s1] sm:$0x3]
    %v151 = vlaneseq
    %v152 = vand.u32 %v151, 127
    %v154 = vunpack.c.l.s4 1966171168
    %v155 = vunpack.c.0.s8 %v154
    %v156 = vlaneseq
    %v157 = vshrl.u32 %v156, 7
    %v158 = vsub.s32 %v155, %v157
    %v159 = vrot.slane %v150, %v158
    %v160 = vcombine.high %v159, %v159
    %v162 = vunpack.c.l.s4 1966171168
    %v163 = vunpack.c.0.s8 %v162
    %v164 = vlaneseq
    %v165 = vshrl.u32 %v164, 7
    %v166 = vsub.s32 %v163, %v165
    %v167 = vrot.slane %v159, %v166
    %v169 = vunpack.c.l.s4 1966171168
    %v170 = vunpack.c.0.s8 %v169
    %v171 = vlaneseq
    %v172 = vshrl.u32 %v171, 7
    %v173 = vsub.s32 %v170, %v172
    %v174 = vrot.slane %v160, %v173
    %175 = vset.pattern.permute.xlu0 0
    %176 = vperm.xlu0 %175, %v167
    %v177 = vpop.permute.xlu0 %176
    %v178 = vlaneseq
    %v179 = vshrl.u32 %v178, 7
    %v180 = vsub.s32 0, %v179
    %v181 = vrot.slane %v177, %v180
    %182 = vset.pattern.permute.xlu0 0
    %183 = vperm.xlu0 %182, %v174
    %v184 = vpop.permute.xlu0 %183
    %v185 = vlaneseq
    %v186 = vshrl.u32 %v185, 7
    %v187 = vsub.s32 0, %v186
    %v188 = vrot.slane %v184, %v187
    %vm189 = vcmp.lt.s32.totalorder %v152, %v181
    %vm190 = vcmp.lt.s32.totalorder %v152, %v188
    %191 = vrot.lane.b32.xlu0 %v148, 96
    %v192 = vpop.permute.xlu0 %191
    %vm193 = vcmask 130048
    %v195 = vsel %vm193, %v148, 0
    %v198 = vsel %vm193, %v192, 0
    %200 = vmatprep.subr.bf16.mxu0 0
    %201 = vmatpush1.bf16.xpose.msra.mxu0 0
    %202 = vmatprep.subr.bf16.mxu0 0
    %203 = vmatpush1.bf16.xpose.msra.mxu0 0
    %204 = vmatprep.subr.bf16.mxu0 0
    %205 = vmatpush1.bf16.xpose.msra.mxu0 0
    %206 = vmatprep.subr.bf16.mxu0 0
    %207 = vmatpush1.bf16.xpose.msra.mxu0 0
    %208 = vmatprep.subr.bf16.mxu0 0
    %209 = vmatpush1.bf16.xpose.msra.mxu0 0
    %210 = vmatprep.subr.bf16.mxu0 0
    %211 = vmatpush1.bf16.xpose.msra.mxu0 0
    %212 = vmatprep.subr.bf16.mxu0 0
    %213 = vmatpush1.bf16.xpose.msra.mxu0 0
    %214 = vmatprep.subr.bf16.mxu0 0
    %215 = vmatpush1.bf16.xpose.msra.mxu0 %v198
    %216 = vmatprep.subr.bf16.mxu0 0
    %217 = vmatpush2.bf16.xpose.msra.mxu0 0
    %218 = vmatprep.subr.bf16.mxu0 0
    %219 = vmatpush2.bf16.xpose.msra.mxu0 0
    %220 = vmatprep.subr.bf16.mxu0 0
    %221 = vmatpush2.bf16.xpose.msra.mxu0 0
    %222 = vmatprep.subr.bf16.mxu0 0
    %223 = vmatpush2.bf16.xpose.msra.mxu0 0
    %224 = vmatprep.subr.bf16.mxu0 0
    %225 = vmatpush2.bf16.xpose.msra.mxu0 0
    %226 = vmatprep.subr.bf16.mxu0 0
    %227 = vmatpush2.bf16.xpose.msra.mxu0 0
    %228 = vmatprep.subr.bf16.mxu0 0
    %229 = vmatpush2.bf16.xpose.msra.mxu0 0
    %230 = vmatprep.subr.bf16.mxu0 0
    %231 = vmatpush2.bf16.xpose.msra.mxu0 0
    %232 = vmatprep.mubr.bf16.mxu0 0
    %233 = vmatmul.mubr.bf16.gmra.mxu0 %v195
    %v234 = vpop.f32.mrf.mxu0
    %v235 = vadd.f32 0.0, %v234
    %v236 = vpop.f32.mrf.mxu0
    %v237 = vpop.f32.mrf.mxu0
    %v238 = vpop.f32.mrf.mxu0
    %239 = vdwg.mxu0
    %240 = vrot.lane.b32.xlu0 %v149, 96
    %v241 = vpop.permute.xlu0 %240
    %v243 = vsel %vm193, %v149, 0
    %v246 = vsel %vm193, %v241, 0
    %248 = vmatprep.subr.bf16.mxu0 0
    %249 = vmatpush1.bf16.xpose.msra.mxu0 0
    %250 = vmatprep.subr.bf16.mxu0 0
    %251 = vmatpush1.bf16.xpose.msra.mxu0 0
    %252 = vmatprep.subr.bf16.mxu0 0
    %253 = vmatpush1.bf16.xpose.msra.mxu0 0
    %254 = vmatprep.subr.bf16.mxu0 0
    %255 = vmatpush1.bf16.xpose.msra.mxu0 0
    %256 = vmatprep.subr.bf16.mxu0 0
    %257 = vmatpush1.bf16.xpose.msra.mxu0 0
    %258 = vmatprep.subr.bf16.mxu0 0
    %259 = vmatpush1.bf16.xpose.msra.mxu0 0
    %260 = vmatprep.subr.bf16.mxu0 0
    %261 = vmatpush1.bf16.xpose.msra.mxu0 0
    %262 = vmatprep.subr.bf16.mxu0 0
    %263 = vmatpush1.bf16.xpose.msra.mxu0 %v246
    %264 = vmatprep.subr.bf16.mxu0 0
    %265 = vmatpush2.bf16.xpose.msra.mxu0 0
    %266 = vmatprep.subr.bf16.mxu0 0
    %267 = vmatpush2.bf16.xpose.msra.mxu0 0
    %268 = vmatprep.subr.bf16.mxu0 0
    %269 = vmatpush2.bf16.xpose.msra.mxu0 0
    %270 = vmatprep.subr.bf16.mxu0 0
    %271 = vmatpush2.bf16.xpose.msra.mxu0 0
    %272 = vmatprep.subr.bf16.mxu0 0
    %273 = vmatpush2.bf16.xpose.msra.mxu0 0
    %274 = vmatprep.subr.bf16.mxu0 0
    %275 = vmatpush2.bf16.xpose.msra.mxu0 0
    %276 = vmatprep.subr.bf16.mxu0 0
    %277 = vmatpush2.bf16.xpose.msra.mxu0 0
    %278 = vmatprep.subr.bf16.mxu0 0
    %279 = vmatpush2.bf16.xpose.msra.mxu0 0
    %280 = vmatprep.mubr.bf16.mxu0 0
    %281 = vmatmul.mubr.bf16.gmra.mxu0 %v243
    %v282 = vpop.f32.mrf.mxu0
    %v283 = vadd.f32 0.0, %v282
    %v284 = vpop.f32.mrf.mxu0
    %v285 = vpop.f32.mrf.mxu0
    %v286 = vpop.f32.mrf.mxu0
    %287 = vdwg.mxu0
    %v288 = vmul.f32 %v235, 0.25
    %v289 = vmul.f32 %v283, 0.25
    %v290 = vsel %vm189, 1, 0
    %v291 = vsel %vm190, 1, 0
    %vm292 = vcmp.eq.s32.totalorder %v290, 1
    %vm293 = vcmp.eq.s32.totalorder %v291, 1
    %v294 = vsel %vm292, %v288, -1000000.0
    %v295 = vsel %vm293, %v289, -1000000.0
    %vm296 = vcmask 64512
    %v297 = vsel %vm296, %v294, -inf
    %298 = vmax.xlane.f32.xlu0 %v297
    %v299 = vpop.xlane.xlu0 %298
    %v300 = vsel %vm296, %v295, -inf
    %301 = vmax.xlane.f32.xlu0 %v300
    %v302 = vpop.xlane.xlu0 %301
    %v303 = vsub.f32 %v294, %v299
    %v304 = vsub.f32 %v295, %v302
    %v305 = vmul.f32 %v303, 1.442695
    %v306 = vpow.pop %v305
    %v307 = vmul.f32 %v304, 1.442695
    %v308 = vpow.pop %v307
    %v309 = vsel %vm296, %v306, 0.0
    %310 = vadd.xlane.f32.xlu0 %v309
    %v311 = vpop.xlane.xlu0 %310
    %v312 = vsel %vm296, %v308, 0.0
    %313 = vadd.xlane.f32.xlu0 %v312
    %v314 = vpop.xlane.xlu0 %313
    %v315 = vrcp.pop %v311
    %v316 = vrcp.pop %v314
    %v317 = vmul.f32 %v306, %v315
    %v318 = vmul.f32 %v308, %v316
    %v319 = vpack.c.bf16 %v317, %v317
    %v320 = vpack.c.bf16 %v318, %v318
    %321 = vrot.lane.b32.xlu0 %v148, 64
    %v322 = vpop.permute.xlu0 %321
    %v324 = vsel %vm296, %v319, 0
    %vm326 = vcmask 1043456
    %v328 = vsel %vm326, %v322, 0
    %330 = vmatprep.subr.bf16.mxu0 0
    %331 = vmatpush1.bf16.msra.mxu0 0
    %332 = vmatprep.subr.bf16.mxu0 0
    %333 = vmatpush1.bf16.msra.mxu0 0
    %334 = vmatprep.subr.bf16.mxu0 0
    %335 = vmatpush1.bf16.msra.mxu0 0
    %336 = vmatprep.subr.bf16.mxu0 0
    %337 = vmatpush1.bf16.msra.mxu0 0
    %338 = vmatprep.subr.bf16.mxu0 0
    %339 = vmatpush1.bf16.msra.mxu0 0
    %340 = vmatprep.subr.bf16.mxu0 0
    %341 = vmatpush1.bf16.msra.mxu0 0
    %342 = vmatprep.subr.bf16.mxu0 0
    %343 = vmatpush1.bf16.msra.mxu0 0
    %344 = vmatprep.subr.bf16.mxu0 0
    %345 = vmatpush1.bf16.msra.mxu0 %v328
    %346 = vmatprep.subr.bf16.mxu0 0
    %347 = vmatpush2.bf16.msra.mxu0 0
    %348 = vmatprep.subr.bf16.mxu0 0
    %349 = vmatpush2.bf16.msra.mxu0 0
    %350 = vmatprep.subr.bf16.mxu0 0
    %351 = vmatpush2.bf16.msra.mxu0 0
    %352 = vmatprep.subr.bf16.mxu0 0
    %353 = vmatpush2.bf16.msra.mxu0 0
    %354 = vmatprep.subr.bf16.mxu0 0
    %355 = vmatpush2.bf16.msra.mxu0 0
    %356 = vmatprep.subr.bf16.mxu0 0
    %357 = vmatpush2.bf16.msra.mxu0 0
    %358 = vmatprep.subr.bf16.mxu0 0
    %359 = vmatpush2.bf16.msra.mxu0 0
    %360 = vmatprep.subr.bf16.mxu0 0
    %361 = vmatpush2.bf16.msra.mxu0 0
    %362 = vmatprep.mubr.bf16.mxu0 0
    %363 = vmatmul.mubr.bf16.gmra.mxu0 %v324
    %v364 = vpop.f32.mrf.mxu0
    %v365 = vadd.f32 0.0, %v364
    %v366 = vpop.f32.mrf.mxu0
    %v367 = vpop.f32.mrf.mxu0
    %v368 = vpop.f32.mrf.mxu0
    %369 = vdwg.mxu0
    %370 = vrot.lane.b32.xlu0 %v149, 64
    %v371 = vpop.permute.xlu0 %370
    %v373 = vsel %vm296, %v320, 0
    %v376 = vsel %vm326, %v371, 0
    %378 = vmatprep.subr.bf16.mxu0 0
    %379 = vmatpush1.bf16.msra.mxu0 0
    %380 = vmatprep.subr.bf16.mxu0 0
    %381 = vmatpush1.bf16.msra.mxu0 0
    %382 = vmatprep.subr.bf16.mxu0 0
    %383 = vmatpush1.bf16.msra.mxu0 0
    %384 = vmatprep.subr.bf16.mxu0 0
    %385 = vmatpush1.bf16.msra.mxu0 0
    %386 = vmatprep.subr.bf16.mxu0 0
    %387 = vmatpush1.bf16.msra.mxu0 0
    %388 = vmatprep.subr.bf16.mxu0 0
    %389 = vmatpush1.bf16.msra.mxu0 0
    %390 = vmatprep.subr.bf16.mxu0 0
    %391 = vmatpush1.bf16.msra.mxu0 0
    %392 = vmatprep.subr.bf16.mxu0 0
    %393 = vmatpush1.bf16.msra.mxu0 %v376
    %394 = vmatprep.subr.bf16.mxu0 0
    %395 = vmatpush2.bf16.msra.mxu0 0
    %396 = vmatprep.subr.bf16.mxu0 0
    %397 = vmatpush2.bf16.msra.mxu0 0
    %398 = vmatprep.subr.bf16.mxu0 0
    %399 = vmatpush2.bf16.msra.mxu0 0
    %400 = vmatprep.subr.bf16.mxu0 0
    %401 = vmatpush2.bf16.msra.mxu0 0
    %402 = vmatprep.subr.bf16.mxu0 0
    %403 = vmatpush2.bf16.msra.mxu0 0
    %404 = vmatprep.subr.bf16.mxu0 0
    %405 = vmatpush2.bf16.msra.mxu0 0
    %406 = vmatprep.subr.bf16.mxu0 0
    %407 = vmatpush2.bf16.msra.mxu0 0
    %408 = vmatprep.subr.bf16.mxu0 0
    %409 = vmatpush2.bf16.msra.mxu0 0
    %410 = vmatprep.mubr.bf16.mxu0 0
    %411 = vmatmul.mubr.bf16.gmra.mxu0 %v373
    %v412 = vpop.f32.mrf.mxu0
    %v413 = vadd.f32 0.0, %v412
    %v414 = vpop.f32.mrf.mxu0
    %v415 = vpop.f32.mrf.mxu0
    %v416 = vpop.f32.mrf.mxu0
    %417 = vdwg.mxu0
    %418 = vrot.lane.b32.xlu0 %v148, 112
    %v419 = vpop.permute.xlu0 %418
    %420 = vrot.lane.b32.xlu0 %v148, 80
    %v421 = vpop.permute.xlu0 %420
    %v423 = vsel %vm193, %v419, 0
    %v426 = vsel %vm193, %v421, 0
    %428 = vmatprep.subr.bf16.mxu0 0
    %429 = vmatpush1.bf16.xpose.msra.mxu0 0
    %430 = vmatprep.subr.bf16.mxu0 0
    %431 = vmatpush1.bf16.xpose.msra.mxu0 0
    %432 = vmatprep.subr.bf16.mxu0 0
    %433 = vmatpush1.bf16.xpose.msra.mxu0 0
    %434 = vmatprep.subr.bf16.mxu0 0
    %435 = vmatpush1.bf16.xpose.msra.mxu0 0
    %436 = vmatprep.subr.bf16.mxu0 0
    %437 = vmatpush1.bf16.xpose.msra.mxu0 0
    %438 = vmatprep.subr.bf16.mxu0 0
    %439 = vmatpush1.bf16.xpose.msra.mxu0 0
    %440 = vmatprep.subr.bf16.mxu0 0
    %441 = vmatpush1.bf16.xpose.msra.mxu0 0
    %442 = vmatprep.subr.bf16.mxu0 0
    %443 = vmatpush1.bf16.xpose.msra.mxu0 %v426
    %444 = vmatprep.subr.bf16.mxu0 0
    %445 = vmatpush2.bf16.xpose.msra.mxu0 0
    %446 = vmatprep.subr.bf16.mxu0 0
    %447 = vmatpush2.bf16.xpose.msra.mxu0 0
    %448 = vmatprep.subr.bf16.mxu0 0
    %449 = vmatpush2.bf16.xpose.msra.mxu0 0
    %450 = vmatprep.subr.bf16.mxu0 0
    %451 = vmatpush2.bf16.xpose.msra.mxu0 0
    %452 = vmatprep.subr.bf16.mxu0 0
    %453 = vmatpush2.bf16.xpose.msra.mxu0 0
    %454 = vmatprep.subr.bf16.mxu0 0
    %455 = vmatpush2.bf16.xpose.msra.mxu0 0
    %456 = vmatprep.subr.bf16.mxu0 0
    %457 = vmatpush2.bf16.xpose.msra.mxu0 0
    %458 = vmatprep.subr.bf16.mxu0 0
    %459 = vmatpush2.bf16.xpose.msra.mxu0 0
    %460 = vmatprep.mubr.bf16.mxu0 0
    %461 = vmatmul.mubr.bf16.gmra.mxu0 %v423
    %v462 = vpop.f32.mrf.mxu0
    %v463 = vadd.f32 0.0, %v462
    %v464 = vpop.f32.mrf.mxu0
    %v465 = vpop.f32.mrf.mxu0
    %v466 = vpop.f32.mrf.mxu0
    %467 = vdwg.mxu0
    %468 = vrot.lane.b32.xlu0 %v149, 112
    %v469 = vpop.permute.xlu0 %468
    %470 = vrot.lane.b32.xlu0 %v149, 80
    %v471 = vpop.permute.xlu0 %470
    %v473 = vsel %vm193, %v469, 0
    %v476 = vsel %vm193, %v471, 0
    %478 = vmatprep.subr.bf16.mxu0 0
    %479 = vmatpush1.bf16.xpose.msra.mxu0 0
    %480 = vmatprep.subr.bf16.mxu0 0
    %481 = vmatpush1.bf16.xpose.msra.mxu0 0
    %482 = vmatprep.subr.bf16.mxu0 0
    %483 = vmatpush1.bf16.xpose.msra.mxu0 0
    %484 = vmatprep.subr.bf16.mxu0 0
    %485 = vmatpush1.bf16.xpose.msra.mxu0 0
    %486 = vmatprep.subr.bf16.mxu0 0
    %487 = vmatpush1.bf16.xpose.msra.mxu0 0
    %488 = vmatprep.subr.bf16.mxu0 0
    %489 = vmatpush1.bf16.xpose.msra.mxu0 0
    %490 = vmatprep.subr.bf16.mxu0 0
    %491 = vmatpush1.bf16.xpose.msra.mxu0 0
    %492 = vmatprep.subr.bf16.mxu0 0
    %493 = vmatpush1.bf16.xpose.msra.mxu0 %v476
    %494 = vmatprep.subr.bf16.mxu0 0
    %495 = vmatpush2.bf16.xpose.msra.mxu0 0
    %496 = vmatprep.subr.bf16.mxu0 0
    %497 = vmatpush2.bf16.xpose.msra.mxu0 0
    %498 = vmatprep.subr.bf16.mxu0 0
    %499 = vmatpush2.bf16.xpose.msra.mxu0 0
    %500 = vmatprep.subr.bf16.mxu0 0
    %501 = vmatpush2.bf16.xpose.msra.mxu0 0
    %502 = vmatprep.subr.bf16.mxu0 0
    %503 = vmatpush2.bf16.xpose.msra.mxu0 0
    %504 = vmatprep.subr.bf16.mxu0 0
    %505 = vmatpush2.bf16.xpose.msra.mxu0 0
    %506 = vmatprep.subr.bf16.mxu0 0
    %507 = vmatpush2.bf16.xpose.msra.mxu0 0
    %508 = vmatprep.subr.bf16.mxu0 0
    %509 = vmatpush2.bf16.xpose.msra.mxu0 0
    %510 = vmatprep.mubr.bf16.mxu0 0
    %511 = vmatmul.mubr.bf16.gmra.mxu0 %v473
    %v512 = vpop.f32.mrf.mxu0
    %v513 = vadd.f32 0.0, %v512
    %v514 = vpop.f32.mrf.mxu0
    %v515 = vpop.f32.mrf.mxu0
    %v516 = vpop.f32.mrf.mxu0
    %517 = vdwg.mxu0
    %v518 = vmul.f32 %v463, 0.25
    %v519 = vmul.f32 %v513, 0.25
    %v520 = vsel %vm292, %v518, -1000000.0
    %v521 = vsel %vm293, %v519, -1000000.0
    %v522 = vsel %vm296, %v520, -inf
    %523 = vmax.xlane.f32.xlu0 %v522
    %v524 = vpop.xlane.xlu0 %523
    %v525 = vsel %vm296, %v521, -inf
    %526 = vmax.xlane.f32.xlu0 %v525
    %v527 = vpop.xlane.xlu0 %526
    %v528 = vsub.f32 %v520, %v524
    %v529 = vsub.f32 %v521, %v527
    %v530 = vmul.f32 %v528, 1.442695
    %v531 = vpow.pop %v530
    %v532 = vmul.f32 %v529, 1.442695
    %v533 = vpow.pop %v532
    %v534 = vsel %vm296, %v531, 0.0
    %535 = vadd.xlane.f32.xlu0 %v534
    %v536 = vpop.xlane.xlu0 %535
    %v537 = vsel %vm296, %v533, 0.0
    %538 = vadd.xlane.f32.xlu0 %v537
    %v539 = vpop.xlane.xlu0 %538
    %v540 = vrcp.pop %v536
    %v541 = vrcp.pop %v539
    %v542 = vmul.f32 %v531, %v540
    %v543 = vmul.f32 %v533, %v541
    %v544 = vpack.c.bf16 %v542, %v542
    %v545 = vpack.c.bf16 %v543, %v543
    %546 = vrot.lane.b32.xlu0 %v148, 48
    %v547 = vpop.permute.xlu0 %546
    %v549 = vsel %vm296, %v544, 0
    %v552 = vsel %vm326, %v547, 0
    %554 = vmatprep.subr.bf16.mxu0 0
    %555 = vmatpush1.bf16.msra.mxu0 0
    %556 = vmatprep.subr.bf16.mxu0 0
    %557 = vmatpush1.bf16.msra.mxu0 0
    %558 = vmatprep.subr.bf16.mxu0 0
    %559 = vmatpush1.bf16.msra.mxu0 0
    %560 = vmatprep.subr.bf16.mxu0 0
    %561 = vmatpush1.bf16.msra.mxu0 0
    %562 = vmatprep.subr.bf16.mxu0 0
    %563 = vmatpush1.bf16.msra.mxu0 0
    %564 = vmatprep.subr.bf16.mxu0 0
    %565 = vmatpush1.bf16.msra.mxu0 0
    %566 = vmatprep.subr.bf16.mxu0 0
    %567 = vmatpush1.bf16.msra.mxu0 0
    %568 = vmatprep.subr.bf16.mxu0 0
    %569 = vmatpush1.bf16.msra.mxu0 %v552
    %570 = vmatprep.subr.bf16.mxu0 0
    %571 = vmatpush2.bf16.msra.mxu0 0
    %572 = vmatprep.subr.bf16.mxu0 0
    %573 = vmatpush2.bf16.msra.mxu0 0
    %574 = vmatprep.subr.bf16.mxu0 0
    %575 = vmatpush2.bf16.msra.mxu0 0
    %576 = vmatprep.subr.bf16.mxu0 0
    %577 = vmatpush2.bf16.msra.mxu0 0
    %578 = vmatprep.subr.bf16.mxu0 0
    %579 = vmatpush2.bf16.msra.mxu0 0
    %580 = vmatprep.subr.bf16.mxu0 0
    %581 = vmatpush2.bf16.msra.mxu0 0
    %582 = vmatprep.subr.bf16.mxu0 0
    %583 = vmatpush2.bf16.msra.mxu0 0
    %584 = vmatprep.subr.bf16.mxu0 0
    %585 = vmatpush2.bf16.msra.mxu0 0
    %586 = vmatprep.mubr.bf16.mxu0 0
    %587 = vmatmul.mubr.bf16.gmra.mxu0 %v549
    %v588 = vpop.f32.mrf.mxu0
    %v589 = vadd.f32 0.0, %v588
    %v590 = vpop.f32.mrf.mxu0
    %v591 = vpop.f32.mrf.mxu0
    %v592 = vpop.f32.mrf.mxu0
    %593 = vdwg.mxu0
    %594 = vrot.lane.b32.xlu0 %v149, 48
    %v595 = vpop.permute.xlu0 %594
    %v597 = vsel %vm296, %v545, 0
    %v600 = vsel %vm326, %v595, 0
    %602 = vmatprep.subr.bf16.mxu0 0
    %603 = vmatpush1.bf16.msra.mxu0 0
    %604 = vmatprep.subr.bf16.mxu0 0
    %605 = vmatpush1.bf16.msra.mxu0 0
    %606 = vmatprep.subr.bf16.mxu0 0
    %607 = vmatpush1.bf16.msra.mxu0 0
    %608 = vmatprep.subr.bf16.mxu0 0
    %609 = vmatpush1.bf16.msra.mxu0 0
    %610 = vmatprep.subr.bf16.mxu0 0
    %611 = vmatpush1.bf16.msra.mxu0 0
    %612 = vmatprep.subr.bf16.mxu0 0
    %613 = vmatpush1.bf16.msra.mxu0 0
    %614 = vmatprep.subr.bf16.mxu0 0
    %615 = vmatpush1.bf16.msra.mxu0 0
    %616 = vmatprep.subr.bf16.mxu0 0
    %617 = vmatpush1.bf16.msra.mxu0 %v600
    %618 = vmatprep.subr.bf16.mxu0 0
    %619 = vmatpush2.bf16.msra.mxu0 0
    %620 = vmatprep.subr.bf16.mxu0 0
    %621 = vmatpush2.bf16.msra.mxu0 0
    %622 = vmatprep.subr.bf16.mxu0 0
    %623 = vmatpush2.bf16.msra.mxu0 0
    %624 = vmatprep.subr.bf16.mxu0 0
    %625 = vmatpush2.bf16.msra.mxu0 0
    %626 = vmatprep.subr.bf16.mxu0 0
    %627 = vmatpush2.bf16.msra.mxu0 0
    %628 = vmatprep.subr.bf16.mxu0 0
    %629 = vmatpush2.bf16.msra.mxu0 0
    %630 = vmatprep.subr.bf16.mxu0 0
    %631 = vmatpush2.bf16.msra.mxu0 0
    %632 = vmatprep.subr.bf16.mxu0 0
    %633 = vmatpush2.bf16.msra.mxu0 0
    %634 = vmatprep.mubr.bf16.mxu0 0
    %635 = vmatmul.mubr.bf16.gmra.mxu0 %v597
    %v636 = vpop.f32.mrf.mxu0
    %v637 = vadd.f32 0.0, %v636
    %v638 = vpop.f32.mrf.mxu0
    %v639 = vpop.f32.mrf.mxu0
    %v640 = vpop.f32.mrf.mxu0
    %641 = vdwg.mxu0
    %644 = vrot.lane.b32.xlu0 %v589, 16
    %v645 = vpop.permute.xlu0 %644
    %646 = vrot.lane.b32.xlu0 %v637, 16
    %v647 = vpop.permute.xlu0 %646
    %v650 = vsel %vm193, %v365, %v645
    %v651 = vsel %vm193, %v413, %v647
    %v652 = vpack.c.bf16 %v651, %v650
    %v653 = vld [vmem:[%s3] sm:$0xf]
    %v654 = vld [vmem:[%s3 + $0x4] sm:$0xf]
    %v655 = vld [vmem:[%s3 + $0x8] sm:$0xf]
    %v656 = vld [vmem:[%s3 + $0xc] sm:$0xf]
    %v661 = vunpack.c.l.b16 %v653
    %v662 = vunpack.c.l.b16 %v654
    %v663 = vunpack.c.l.b16 %v655
    %v664 = vunpack.c.l.b16 %v656
    %v665 = vpack.c.b16 %v662, %v661
    %v666 = vpack.c.b16 %v664, %v663
    %v670 = vsel %vm99, %v652, 0
    %672 = vmatprep.subr.bf16.mxu0 0
    %673 = vmatpush1.bf16.msra.mxu0 0
    %674 = vmatprep.subr.bf16.mxu0 0
    %675 = vmatpush1.bf16.msra.mxu0 0
    %676 = vmatprep.subr.bf16.mxu0 0
    %677 = vmatpush1.bf16.msra.mxu0 0
    %678 = vmatprep.subr.bf16.mxu0 0
    %679 = vmatpush1.bf16.msra.mxu0 0
    %680 = vmatprep.subr.bf16.mxu0 0
    %681 = vmatpush1.bf16.msra.mxu0 0
    %682 = vmatprep.subr.bf16.mxu0 0
    %683 = vmatpush1.bf16.msra.mxu0 0
    %684 = vmatprep.subr.bf16.mxu0 0
    %685 = vmatpush1.bf16.msra.mxu0 %v666
    %686 = vmatprep.subr.bf16.mxu0 0
    %687 = vmatpush1.bf16.msra.mxu0 %v665
    %688 = vmatprep.subr.bf16.mxu0 0
    %689 = vmatpush2.bf16.msra.mxu0 0
    %690 = vmatprep.subr.bf16.mxu0 0
    %691 = vmatpush2.bf16.msra.mxu0 0
    %692 = vmatprep.subr.bf16.mxu0 0
    %693 = vmatpush2.bf16.msra.mxu0 0
    %694 = vmatprep.subr.bf16.mxu0 0
    %695 = vmatpush2.bf16.msra.mxu0 0
    %696 = vmatprep.subr.bf16.mxu0 0
    %697 = vmatpush2.bf16.msra.mxu0 0
    %698 = vmatprep.subr.bf16.mxu0 0
    %699 = vmatpush2.bf16.msra.mxu0 0
    %700 = vmatprep.subr.bf16.mxu0 0
    %701 = vmatpush2.bf16.msra.mxu0 0
    %702 = vmatprep.subr.bf16.mxu0 0
    %703 = vmatpush2.bf16.msra.mxu0 0
    %704 = vmatprep.mubr.bf16.mxu0 0
    %705 = vmatmul.mubr.bf16.gmra.mxu0 %v670
    %v706 = vpop.f32.mrf.mxu0
    %v707 = vadd.f32 %v80, %v706
    %v708 = vpop.f32.mrf.mxu0
    %v709 = vpop.f32.mrf.mxu0
    %v710 = vadd.f32 %v81, %v709
    %v711 = vpop.f32.mrf.mxu0
    %712 = vdwg.mxu0
    %v713 = vld [vmem:[%s4] sm:$0x1]
    %v714 = vld [vmem:[#allocation2] sm:$0x1]
    %v715 = vsel %vm99, %v707, 0.0
    %716 = vadd.xlane.f32.xlu0 %v715
    %v717 = vpop.xlane.xlu0 %716
    %v718 = vsel %vm99, %v710, 0.0
    %719 = vadd.xlane.f32.xlu0 %v718
    %v720 = vpop.xlane.xlu0 %719
    %v721 = vrcp.pop 32.0
    %v722 = vmul.f32 %v717, %v721
    %v723 = vmul.f32 %v720, %v721
    %v724 = vsub.f32 %v707, %v722
    %v725 = vsub.f32 %v710, %v723
    %v726 = vmul.f32 %v724, %v724
    %v727 = vmul.f32 %v725, %v725
    %v728 = vsel %vm99, %v726, 0.0
    %729 = vadd.xlane.f32.xlu0 %v728
    %v730 = vpop.xlane.xlu0 %729
    %v731 = vsel %vm99, %v727, 0.0
    %732 = vadd.xlane.f32.xlu0 %v731
    %v733 = vpop.xlane.xlu0 %732
    %v734 = vmul.f32 %v730, %v721
    %v735 = vmul.f32 %v733, %v721
    %v736 = vadd.f32 %v734, 1e-05
    %v737 = vadd.f32 %v735, 1e-05
    %v738 = vrsqrt.pop %v736
    %v739 = vrsqrt.pop %v737
    %v740 = vmul.f32 %v724, %v738
    %v741 = vmul.f32 %v725, %v739
    %v743 = vlaneseq
    %v744 = vshrl.u32 %v743, 7
    %v745 = vsub.s32 0, %v744
    %v746 = vrot.slane %v713, %v745
    %v748 = vmul.f32 %v740, %v746
    %v749 = vmul.f32 %v741, %v746
    %v751 = vlaneseq
    %v752 = vshrl.u32 %v751, 7
    %v753 = vsub.s32 0, %v752
    %v754 = vrot.slane %v714, %v753
    %v756 = vadd.f32 %v748, %v754
    %v757 = vadd.f32 %v749, %v754
    %v758 = vpack.c.bf16 %v757, %v756
    %v759 = vld [vmem:[#allocation5] sm:$0xf]
    %v760 = vld [vmem:[#allocation5 + $0x4] sm:$0xf]
    %v761 = vld [vmem:[#allocation5 + $0x8] sm:$0xf]
    %v762 = vld [vmem:[#allocation5 + $0xc] sm:$0xf]
    %v763 = vld [vmem:[#allocation7] sm:$0x1]
    %v765 = vlaneseq
    %v766 = vshrl.u32 %v765, 7
    %v767 = vsub.s32 0, %v766
    %v768 = vrot.slane %v763, %v767
    %v774 = vunpack.c.l.b16 %v759
    %v775 = vunpack.c.l.b16 %v760
    %v776 = vunpack.c.l.b16 %v761
    %v777 = vunpack.c.l.b16 %v762
    %v778 = vpack.c.b16 %v775, %v774
    %v779 = vpack.c.b16 %v777, %v776
    %v783 = vsel %vm99, %v758, 0
    %785 = vmatprep.subr.bf16.mxu0 0
    %786 = vmatpush1.bf16.msra.mxu0 0
    %787 = vmatprep.subr.bf16.mxu0 0
    %788 = vmatpush1.bf16.msra.mxu0 0
    %789 = vmatprep.subr.bf16.mxu0 0
    %790 = vmatpush1.bf16.msra.mxu0 0
    %791 = vmatprep.subr.bf16.mxu0 0
    %792 = vmatpush1.bf16.msra.mxu0 0
    %793 = vmatprep.subr.bf16.mxu0 0
    %794 = vmatpush1.bf16.msra.mxu0 0
    %795 = vmatprep.subr.bf16.mxu0 0
    %796 = vmatpush1.bf16.msra.mxu0 0
    %797 = vmatprep.subr.bf16.mxu0 0
    %798 = vmatpush1.bf16.msra.mxu0 %v779
    %799 = vmatprep.subr.bf16.mxu0 0
    %800 = vmatpush1.bf16.msra.mxu0 %v778
    %801 = vmatprep.subr.bf16.mxu0 0
    %802 = vmatpush2.bf16.msra.mxu0 0
    %803 = vmatprep.subr.bf16.mxu0 0
    %804 = vmatpush2.bf16.msra.mxu0 0
    %805 = vmatprep.subr.bf16.mxu0 0
    %806 = vmatpush2.bf16.msra.mxu0 0
    %807 = vmatprep.subr.bf16.mxu0 0
    %808 = vmatpush2.bf16.msra.mxu0 0
    %809 = vmatprep.subr.bf16.mxu0 0
    %810 = vmatpush2.bf16.msra.mxu0 0
    %811 = vmatprep.subr.bf16.mxu0 0
    %812 = vmatpush2.bf16.msra.mxu0 0
    %813 = vmatprep.subr.bf16.mxu0 0
    %814 = vmatpush2.bf16.msra.mxu0 0
    %815 = vmatprep.subr.bf16.mxu0 0
    %816 = vmatpush2.bf16.msra.mxu0 0
    %817 = vmatprep.mubr.bf16.mxu0 0
    %818 = vmatmul.mubr.bf16.gmra.mxu0 %v783
    %v819 = vpop.f32.mrf.mxu0
    %v820 = vadd.f32 %v768, %v819
    %v821 = vpop.f32.mrf.mxu0
    %v822 = vpop.f32.mrf.mxu0
    %v823 = vadd.f32 %v768, %v822
    %v824 = vpop.f32.mrf.mxu0
    %825 = vdwg.mxu0
    %v826 = vmax.f32 %v820, 0.0
    %v827 = vmax.f32 %v823, 0.0
    %v828 = vpack.c.bf16 %v827, %v826
    %v829 = vld [vmem:[%s8] sm:$0xf]
    %v830 = vld [vmem:[%s8 + $0x4] sm:$0xf]
    %v831 = vld [vmem:[%s8 + $0x8] sm:$0xf]
    %v832 = vld [vmem:[%s8 + $0xc] sm:$0xf]
    %v833 = vld [vmem:[%s8 + $0x10] sm:$0xf]
    %v834 = vld [vmem:[%s8 + $0x14] sm:$0xf]
    %v835 = vld [vmem:[%s8 + $0x18] sm:$0xf]
    %v836 = vld [vmem:[%s8 + $0x1c] sm:$0xf]
    %v837 = vld [vmem:[%s9] sm:$0x1]
    %v839 = vlaneseq
    %v840 = vshrl.u32 %v839, 7
    %v841 = vsub.s32 0, %v840
    %v842 = vrot.slane %v837, %v841
    %v852 = vunpack.c.l.b16 %v829
    %v853 = vunpack.c.l.b16 %v830
    %v854 = vunpack.c.l.b16 %v831
    %v855 = vunpack.c.l.b16 %v832
    %v856 = vunpack.c.l.b16 %v833
    %v857 = vunpack.c.l.b16 %v834
    %v858 = vunpack.c.l.b16 %v835
    %v859 = vunpack.c.l.b16 %v836
    %v860 = vpack.c.b16 %v853, %v852
    %v861 = vpack.c.b16 %v855, %v854
    %v862 = vpack.c.b16 %v857, %v856
    %v863 = vpack.c.b16 %v859, %v858
    %vm868 = vcmask 523264
    %v870 = vsel %vm868, %v828, 0
    %872 = vmatprep.subr.bf16.mxu0 0
    %873 = vmatpush1.bf16.msra.mxu0 0
    %874 = vmatprep.subr.bf16.mxu0 0
    %875 = vmatpush1.bf16.msra.mxu0 0
    %876 = vmatprep.subr.bf16.mxu0 0
    %877 = vmatpush1.bf16.msra.mxu0 0
    %878 = vmatprep.subr.bf16.mxu0 0
    %879 = vmatpush1.bf16.msra.mxu0 0
    %880 = vmatprep.subr.bf16.mxu0 0
    %881 = vmatpush1.bf16.msra.mxu0 %v863
    %882 = vmatprep.subr.bf16.mxu0 0
    %883 = vmatpush1.bf16.msra.mxu0 %v862
    %884 = vmatprep.subr.bf16.mxu0 0
    %885 = vmatpush1.bf16.msra.mxu0 %v861
    %886 = vmatprep.subr.bf16.mxu0 0
    %887 = vmatpush1.bf16.msra.mxu0 %v860
    %888 = vmatprep.subr.bf16.mxu0 0
    %889 = vmatpush2.bf16.msra.mxu0 0
    %890 = vmatprep.subr.bf16.mxu0 0
    %891 = vmatpush2.bf16.msra.mxu0 0
    %892 = vmatprep.subr.bf16.mxu0 0
    %893 = vmatpush2.bf16.msra.mxu0 0
    %894 = vmatprep.subr.bf16.mxu0 0
    %895 = vmatpush2.bf16.msra.mxu0 0
    %896 = vmatprep.subr.bf16.mxu0 0
    %897 = vmatpush2.bf16.msra.mxu0 0
    %898 = vmatprep.subr.bf16.mxu0 0
    %899 = vmatpush2.bf16.msra.mxu0 0
    %900 = vmatprep.subr.bf16.mxu0 0
    %901 = vmatpush2.bf16.msra.mxu0 0
    %902 = vmatprep.subr.bf16.mxu0 0
    %903 = vmatpush2.bf16.msra.mxu0 0
    %904 = vmatprep.mubr.bf16.mxu0 0
    %905 = vmatmul.mubr.bf16.gmra.mxu0 %v870
    %v906 = vpop.f32.mrf.mxu0
    %v907 = vadd.f32 %v842, %v906
    %v908 = vpop.f32.mrf.mxu0
    %v909 = vpop.f32.mrf.mxu0
    %v910 = vadd.f32 %v842, %v909
    %v911 = vpop.f32.mrf.mxu0
    %912 = vdwg.mxu0
    %v913 = vadd.f32 %v756, %v907
    %v914 = vadd.f32 %v757, %v910
    %v915 = vld [vmem:[%s10] sm:$0x1]
    %v916 = vld [vmem:[%s11] sm:$0x1]
    %v917 = vsel %vm99, %v913, 0.0
    %918 = vadd.xlane.f32.xlu0 %v917
    %v919 = vpop.xlane.xlu0 %918
    %v920 = vsel %vm99, %v914, 0.0
    %921 = vadd.xlane.f32.xlu0 %v920
    %v922 = vpop.xlane.xlu0 %921
    %v923 = vmul.f32 %v919, %v721
    %v924 = vmul.f32 %v922, %v721
    %v925 = vsub.f32 %v913, %v923
    %v926 = vsub.f32 %v914, %v924
    %v927 = vmul.f32 %v925, %v925
    %v928 = vmul.f32 %v926, %v926
    %v929 = vsel %vm99, %v927, 0.0
    %930 = vadd.xlane.f32.xlu0 %v929
    %v931 = vpop.xlane.xlu0 %930
    %v932 = vsel %vm99, %v928, 0.0
    %933 = vadd.xlane.f32.xlu0 %v932
    %v934 = vpop.xlane.xlu0 %933
    %v935 = vmul.f32 %v931, %v721
    %v936 = vmul.f32 %v934, %v721
    %v937 = vadd.f32 %v935, 1e-05
    %v938 = vadd.f32 %v936, 1e-05
    %v939 = vrsqrt.pop %v937
    %v940 = vrsqrt.pop %v938
    %v941 = vmul.f32 %v925, %v939
    %v942 = vmul.f32 %v926, %v940
    %v944 = vlaneseq
    %v945 = vshrl.u32 %v944, 7
    %v946 = vsub.s32 0, %v945
    %v947 = vrot.slane %v915, %v946
    %v949 = vmul.f32 %v941, %v947
    %v950 = vmul.f32 %v942, %v947
    %v952 = vlaneseq
    %v953 = vshrl.u32 %v952, 7
    %v954 = vsub.s32 0, %v953
    %v955 = vrot.slane %v916, %v954
    %v957 = vadd.f32 %v949, %v955
    %v958 = vadd.f32 %v950, %v955
    %959 = vst.msk [vmem:[#allocation8] sm:$0xff] %vm99, %v957
    %960 = vst.msk [vmem:[#allocation8 + $0x8] sm:$0xff] %vm99, %v958
    // Predicated region
    $region62: #{tpu_custom_call.1} parent=1 // pred_check
      _
    $region63: #{tpu_custom_call.1} parent=1 // pred_check_branch
      %962 = sbr.rel (0) target = $region65
    $region64: #{tpu_custom_call.1} parent=1 // pred_region
      %s964 = ssub.s32 256, 256
      %965 = vsyncadd [#allocation4], %s964
      %s966 = sshll.u32 [#allocation8], 4
      %s967 = int_to_ptr.vmem [resolvable:$true] %s966
      %972 = dma.vmem_to_hbm [thread:$0]  %s967, 256, %s12, [#allocation4], 128, 128, 8
    $region65: #{tpu_custom_call.1} parent=1 // pred_fallthru
      _
    // Predicated region
    $region66: #{tpu_custom_call.1} parent=1 // pred_check
      _
    $region67: #{tpu_custom_call.1} parent=1 // pred_check_branch
      %974 = sbr.rel (0) target = $region69
    $region68: #{tpu_custom_call.1} parent=1 // pred_region
      %975 = dma.done [#allocation4], 256
    $region69: #{tpu_custom_call.1} parent=1 // pred_fallthru
      _
    %976 = vsyncpa [#allocation3], 1
    %977 = vsyncpa [#allocation6], 1
    %978 = vsyncpa [#allocation4], 1

</llo_original>
